<compile_context>
chip_gen: v5e
topology: v5e:2x2
jax: 0.10.0
libtpu: 0.0.40
codegen_flags: <defaults>
</compile_context>

<pallas_src>
import jax
import jax.numpy as jnp
from jax.experimental import pallas as pl
from jax.experimental.pallas import tpu as pltpu


def _round_up(x: int, m: int) -> int:
    return ((x + m - 1) // m) * m


def _gather_kernel(idx_ref, table_ref, out_ref, buf_ref, sems):
    # idx_ref  : (n_pad,) int32 in SMEM (scalar prefetch)
    # table_ref: (num_embeddings, embedding_dim) f32 in HBM (no auto-DMA)
    # out_ref  : (tm, embedding_dim) f32 VMEM output block
    # buf_ref  : (tm, embedding_dim) f32 VMEM scratch (DMA landing buffer)
    # sems     : (tm,) DMA semaphores
    tm = out_ref.shape[0]
    num_emb = table_ref.shape[0]
    base = pl.program_id(0) * tm

    copies = []
    for r in range(tm):  # static unroll: tm is a compile-time constant
        row = idx_ref[base + r]
        # Clamp for DMA safety.  NOTE(semantics): the one-hot reference would
        # produce an all-zero row for an out-of-range index (and PyTorch's
        # eye()[index] would raise); here out-of-range indices are clamped
        # into range instead.  In-range indices are bit-exact.
        row = jnp.minimum(jnp.maximum(row, 0), num_emb - 1)
        cp = pltpu.make_async_copy(
            table_ref.at[pl.ds(row, 1), :],
            buf_ref.at[pl.ds(r, 1), :],
            sems.at[r],
        )
        cp.start()
        copies.append(cp)
    # All row DMAs are in flight; drain them, then write the output block.
    for cp in copies:
        cp.wait()
    out_ref[...] = buf_ref[...]


def custom_embedding(index, table, *, block_rows=128):
    """Embedding lookup equivalent to CustomEmbedding.forward.

    index : int array of any shape (token ids).
    table : (num_embeddings, embedding_dim) float32.  This is `linear.weight.T`
            stored pre-transposed once at parameter-setup time, so the per-call
            hot path never materializes an HBM transpose of the table.
    Returns: index.shape + (embedding_dim,) float32, out[..., :] = table[index].
    """
    num_embeddings, embedding_dim = table.shape
    orig_shape = index.shape
    idx = index.reshape(-1).astype(jnp.int32)
    n = idx.shape[0]

    # Tokens gathered per grid step (amortizes per-step overhead, keeps the
    # output block's sublane dim a multiple of 8).
    tm = min(block_rows, _round_up(max(n, 1), 8))
    n_pad = _round_up(n, tm)
    if n_pad != n:
        idx = jnp.pad(idx, (0, n_pad - n))

    grid = (n_pad // tm,)

    out = pl.pallas_call(
        _gather_kernel,
        out_shape=jax.ShapeDtypeStruct((n_pad, embedding_dim), table.dtype),
        grid_spec=pltpu.PrefetchScalarGridSpec(
            num_scalar_prefetch=1,            # indices -> SMEM scalar path
            grid=grid,
            in_specs=[pl.BlockSpec(memory_space=pl.ANY)],   # table stays in HBM
            out_specs=pl.BlockSpec((tm, embedding_dim), lambda i, idx_ref: (i, 0)),
            scratch_shapes=[
                pltpu.VMEM((tm, embedding_dim), table.dtype),
                pltpu.SemaphoreType.DMA((tm,)),
            ],
        ),
        compiler_params=pltpu.CompilerParams(
            dimension_semantics=("parallel",),       # shard token blocks across TCs
            vmem_limit_bytes=32 * 1024 * 1024,
        ),
        cost_estimate=pl.CostEstimate(
            flops=0,
            transcendentals=0,
            bytes_accessed=2 * n_pad * embedding_dim * 4 + n_pad * 4,
        ),
    )(idx, table)

    return out[:n].reshape(*orig_shape, embedding_dim)


if __name__ == "__main__":
    num_embeddings = 16
    embedding_dim = 32
    batch, seq = 2, 8

    key = jax.random.PRNGKey(0)
    k_w, k_idx = jax.random.split(key)

    # Match torch.nn.Linear(num_embeddings, embedding_dim, bias=False) init:
    # weight shape (embedding_dim, num_embeddings), U(-1/sqrt(in), 1/sqrt(in)).
    bound = 1.0 / jnp.sqrt(jnp.float32(num_embeddings))
    linear_weight = jax.random.uniform(
        k_w, (embedding_dim, num_embeddings), jnp.float32, -bound, bound)
    # Store the table pre-transposed ONCE at init (not per call).
    table = jnp.asarray(linear_weight.T)          # (num_embeddings, embedding_dim)

    index = jax.random.randint(k_idx, (batch, seq), 0, num_embeddings, jnp.int32)

    out = custom_embedding(index, table)
    out = jax.block_until_ready(out)

    # Reference: one_hot(index) @ linear_weight.T == gather of table rows.
    ref = table[index]
    assert out.shape == (batch, seq, embedding_dim)
    assert jnp.allclose(out, ref, atol=1e-6), "mismatch vs reference"

    print("KERNEL_OK")
</pallas_src>

<mosaic_0001>
module attributes {stable_mosaic.version = 11 : i64} {
  func.func @_gather_kernel(%arg0: i32, %arg1: memref<16xi32, #tpu.memory_space<smem>>, %arg2: memref<16x32xf32, #tpu.memory_space<any>>, %arg3: memref<16x32xf32, #tpu.memory_space<vmem>>, %arg4: memref<16x32xf32, #tpu.memory_space<vmem>>, %arg5: memref<16x!tpu.dma_semaphore, #tpu.memory_space<semaphore_mem>>) attributes {dimension_semantics = [#tpu.dimension_semantics<parallel>], iteration_bounds = array<i64: 1>, scalar_prefetch = 1 : i64, scratch_operands = 2 : i64, tpu.core_type = #tpu.core_type<tc>, window_params = [{}, {transform_indices = @transform_1, window_bounds = array<i64: 16, 32>}]} {
    %c16_i32 = arith.constant 16 : i32
    %0 = arith.muli %arg0, %c16_i32 : i32
    %c0_i32 = arith.constant 0 : i32
    %1 = arith.addi %0, %c0_i32 : i32
    %2 = arith.index_cast %1 : i32 to index
    %3 = memref.load %arg1[%2] : memref<16xi32, #tpu.memory_space<smem>>
    %c0_i32_0 = arith.constant 0 : i32
    %4 = arith.maxsi %3, %c0_i32_0 : i32
    %c15_i32 = arith.constant 15 : i32
    %5 = arith.minsi %4, %c15_i32 : i32
    %c0_i32_1 = arith.constant 0 : i32
    %c0_i32_2 = arith.constant 0 : i32
    %6 = tpu.memref_slice %arg2[%5, %c0_i32_2] : memref<16x32xf32, #tpu.memory_space<any>> -> memref<1x32xf32, #tpu.memory_space<any>>
    %c0_i32_3 = arith.constant 0 : i32
    %c0_i32_4 = arith.constant 0 : i32
    %7 = tpu.memref_slice %arg4[%c0_i32_3, %c0_i32_4] : memref<16x32xf32, #tpu.memory_space<vmem>> -> memref<1x32xf32, #tpu.memory_space<vmem>>
    %8 = tpu.memref_slice %arg5[%c0_i32_1] : memref<16x!tpu.dma_semaphore, #tpu.memory_space<semaphore_mem>> -> memref<1x!tpu.dma_semaphore, #tpu.memory_space<semaphore_mem>>
    %9 = tpu.memref_squeeze %8 : memref<1x!tpu.dma_semaphore, #tpu.memory_space<semaphore_mem>> -> memref<!tpu.dma_semaphore, #tpu.memory_space<semaphore_mem>>
    tpu.enqueue_dma source(%6 : memref<1x32xf32, #tpu.memory_space<any>>) target(%7 : memref<1x32xf32, #tpu.memory_space<vmem>>) target_semaphore(%9 : memref<!tpu.dma_semaphore, #tpu.memory_space<semaphore_mem>>)
    %c1_i32 = arith.constant 1 : i32
    %10 = arith.addi %0, %c1_i32 : i32
    %11 = arith.index_cast %10 : i32 to index
    %12 = memref.load %arg1[%11] : memref<16xi32, #tpu.memory_space<smem>>
    %c0_i32_5 = arith.constant 0 : i32
    %13 = arith.maxsi %12, %c0_i32_5 : i32
    %c15_i32_6 = arith.constant 15 : i32
    %14 = arith.minsi %13, %c15_i32_6 : i32
    %c1_i32_7 = arith.constant 1 : i32
    %c0_i32_8 = arith.constant 0 : i32
    %15 = tpu.memref_slice %arg2[%14, %c0_i32_8] : memref<16x32xf32, #tpu.memory_space<any>> -> memref<1x32xf32, #tpu.memory_space<any>>
    %c1_i32_9 = arith.constant 1 : i32
    %c0_i32_10 = arith.constant 0 : i32
    %16 = tpu.memref_slice %arg4[%c1_i32_9, %c0_i32_10] : memref<16x32xf32, #tpu.memory_space<vmem>> -> memref<1x32xf32, #tpu.memory_space<vmem>>
    %17 = tpu.memref_slice %arg5[%c1_i32_7] : memref<16x!tpu.dma_semaphore, #tpu.memory_space<semaphore_mem>> -> memref<1x!tpu.dma_semaphore, #tpu.memory_space<semaphore_mem>>
    %18 = tpu.memref_squeeze %17 : memref<1x!tpu.dma_semaphore, #tpu.memory_space<semaphore_mem>> -> memref<!tpu.dma_semaphore, #tpu.memory_space<semaphore_mem>>
    tpu.enqueue_dma source(%15 : memref<1x32xf32, #tpu.memory_space<any>>) target(%16 : memref<1x32xf32, #tpu.memory_space<vmem>>) target_semaphore(%18 : memref<!tpu.dma_semaphore, #tpu.memory_space<semaphore_mem>>)
    %c2_i32 = arith.constant 2 : i32
    %19 = arith.addi %0, %c2_i32 : i32
    %20 = arith.index_cast %19 : i32 to index
    %21 = memref.load %arg1[%20] : memref<16xi32, #tpu.memory_space<smem>>
    %c0_i32_11 = arith.constant 0 : i32
    %22 = arith.maxsi %21, %c0_i32_11 : i32
    %c15_i32_12 = arith.constant 15 : i32
    %23 = arith.minsi %22, %c15_i32_12 : i32
    %c2_i32_13 = arith.constant 2 : i32
    %c0_i32_14 = arith.constant 0 : i32
    %24 = tpu.memref_slice %arg2[%23, %c0_i32_14] : memref<16x32xf32, #tpu.memory_space<any>> -> memref<1x32xf32, #tpu.memory_space<any>>
    %c2_i32_15 = arith.constant 2 : i32
    %c0_i32_16 = arith.constant 0 : i32
    %25 = tpu.memref_slice %arg4[%c2_i32_15, %c0_i32_16] : memref<16x32xf32, #tpu.memory_space<vmem>> -> memref<1x32xf32, #tpu.memory_space<vmem>>
    %26 = tpu.memref_slice %arg5[%c2_i32_13] : memref<16x!tpu.dma_semaphore, #tpu.memory_space<semaphore_mem>> -> memref<1x!tpu.dma_semaphore, #tpu.memory_space<semaphore_mem>>
    %27 = tpu.memref_squeeze %26 : memref<1x!tpu.dma_semaphore, #tpu.memory_space<semaphore_mem>> -> memref<!tpu.dma_semaphore, #tpu.memory_space<semaphore_mem>>
    tpu.enqueue_dma source(%24 : memref<1x32xf32, #tpu.memory_space<any>>) target(%25 : memref<1x32xf32, #tpu.memory_space<vmem>>) target_semaphore(%27 : memref<!tpu.dma_semaphore, #tpu.memory_space<semaphore_mem>>)
    %c3_i32 = arith.constant 3 : i32
    %28 = arith.addi %0, %c3_i32 : i32
    %29 = arith.index_cast %28 : i32 to index
    %30 = memref.load %arg1[%29] : memref<16xi32, #tpu.memory_space<smem>>
    %c0_i32_17 = arith.constant 0 : i32
    %31 = arith.maxsi %30, %c0_i32_17 : i32
    %c15_i32_18 = arith.constant 15 : i32
    %32 = arith.minsi %31, %c15_i32_18 : i32
    %c3_i32_19 = arith.constant 3 : i32
    %c0_i32_20 = arith.constant 0 : i32
    %33 = tpu.memref_slice %arg2[%32, %c0_i32_20] : memref<16x32xf32, #tpu.memory_space<any>> -> memref<1x32xf32, #tpu.memory_space<any>>
    %c3_i32_21 = arith.constant 3 : i32
    %c0_i32_22 = arith.constant 0 : i32
    %34 = tpu.memref_slice %arg4[%c3_i32_21, %c0_i32_22] : memref<16x32xf32, #tpu.memory_space<vmem>> -> memref<1x32xf32, #tpu.memory_space<vmem>>
    %35 = tpu.memref_slice %arg5[%c3_i32_19] : memref<16x!tpu.dma_semaphore, #tpu.memory_space<semaphore_mem>> -> memref<1x!tpu.dma_semaphore, #tpu.memory_space<semaphore_mem>>
    %36 = tpu.memref_squeeze %35 : memref<1x!tpu.dma_semaphore, #tpu.memory_space<semaphore_mem>> -> memref<!tpu.dma_semaphore, #tpu.memory_space<semaphore_mem>>
    tpu.enqueue_dma source(%33 : memref<1x32xf32, #tpu.memory_space<any>>) target(%34 : memref<1x32xf32, #tpu.memory_space<vmem>>) target_semaphore(%36 : memref<!tpu.dma_semaphore, #tpu.memory_space<semaphore_mem>>)
    %c4_i32 = arith.constant 4 : i32
    %37 = arith.addi %0, %c4_i32 : i32
    %38 = arith.index_cast %37 : i32 to index
    %39 = memref.load %arg1[%38] : memref<16xi32, #tpu.memory_space<smem>>
    %c0_i32_23 = arith.constant 0 : i32
    %40 = arith.maxsi %39, %c0_i32_23 : i32
    %c15_i32_24 = arith.constant 15 : i32
    %41 = arith.minsi %40, %c15_i32_24 : i32
    %c4_i32_25 = arith.constant 4 : i32
    %c0_i32_26 = arith.constant 0 : i32
    %42 = tpu.memref_slice %arg2[%41, %c0_i32_26] : memref<16x32xf32, #tpu.memory_space<any>> -> memref<1x32xf32, #tpu.memory_space<any>>
    %c4_i32_27 = arith.constant 4 : i32
    %c0_i32_28 = arith.constant 0 : i32
    %43 = tpu.memref_slice %arg4[%c4_i32_27, %c0_i32_28] : memref<16x32xf32, #tpu.memory_space<vmem>> -> memref<1x32xf32, #tpu.memory_space<vmem>>
    %44 = tpu.memref_slice %arg5[%c4_i32_25] : memref<16x!tpu.dma_semaphore, #tpu.memory_space<semaphore_mem>> -> memref<1x!tpu.dma_semaphore, #tpu.memory_space<semaphore_mem>>
    %45 = tpu.memref_squeeze %44 : memref<1x!tpu.dma_semaphore, #tpu.memory_space<semaphore_mem>> -> memref<!tpu.dma_semaphore, #tpu.memory_space<semaphore_mem>>
    tpu.enqueue_dma source(%42 : memref<1x32xf32, #tpu.memory_space<any>>) target(%43 : memref<1x32xf32, #tpu.memory_space<vmem>>) target_semaphore(%45 : memref<!tpu.dma_semaphore, #tpu.memory_space<semaphore_mem>>)
    %c5_i32 = arith.constant 5 : i32
    %46 = arith.addi %0, %c5_i32 : i32
    %47 = arith.index_cast %46 : i32 to index
    %48 = memref.load %arg1[%47] : memref<16xi32, #tpu.memory_space<smem>>
    %c0_i32_29 = arith.constant 0 : i32
    %49 = arith.maxsi %48, %c0_i32_29 : i32
    %c15_i32_30 = arith.constant 15 : i32
    %50 = arith.minsi %49, %c15_i32_30 : i32
    %c5_i32_31 = arith.constant 5 : i32
    %c0_i32_32 = arith.constant 0 : i32
    %51 = tpu.memref_slice %arg2[%50, %c0_i32_32] : memref<16x32xf32, #tpu.memory_space<any>> -> memref<1x32xf32, #tpu.memory_space<any>>
    %c5_i32_33 = arith.constant 5 : i32
    %c0_i32_34 = arith.constant 0 : i32
    %52 = tpu.memref_slice %arg4[%c5_i32_33, %c0_i32_34] : memref<16x32xf32, #tpu.memory_space<vmem>> -> memref<1x32xf32, #tpu.memory_space<vmem>>
    %53 = tpu.memref_slice %arg5[%c5_i32_31] : memref<16x!tpu.dma_semaphore, #tpu.memory_space<semaphore_mem>> -> memref<1x!tpu.dma_semaphore, #tpu.memory_space<semaphore_mem>>
    %54 = tpu.memref_squeeze %53 : memref<1x!tpu.dma_semaphore, #tpu.memory_space<semaphore_mem>> -> memref<!tpu.dma_semaphore, #tpu.memory_space<semaphore_mem>>
    tpu.enqueue_dma source(%51 : memref<1x32xf32, #tpu.memory_space<any>>) target(%52 : memref<1x32xf32, #tpu.memory_space<vmem>>) target_semaphore(%54 : memref<!tpu.dma_semaphore, #tpu.memory_space<semaphore_mem>>)
    %c6_i32 = arith.constant 6 : i32
    %55 = arith.addi %0, %c6_i32 : i32
    %56 = arith.index_cast %55 : i32 to index
    %57 = memref.load %arg1[%56] : memref<16xi32, #tpu.memory_space<smem>>
    %c0_i32_35 = arith.constant 0 : i32
    %58 = arith.maxsi %57, %c0_i32_35 : i32
    %c15_i32_36 = arith.constant 15 : i32
    %59 = arith.minsi %58, %c15_i32_36 : i32
    %c6_i32_37 = arith.constant 6 : i32
    %c0_i32_38 = arith.constant 0 : i32
    %60 = tpu.memref_slice %arg2[%59, %c0_i32_38] : memref<16x32xf32, #tpu.memory_space<any>> -> memref<1x32xf32, #tpu.memory_space<any>>
    %c6_i32_39 = arith.constant 6 : i32
    %c0_i32_40 = arith.constant 0 : i32
    %61 = tpu.memref_slice %arg4[%c6_i32_39, %c0_i32_40] : memref<16x32xf32, #tpu.memory_space<vmem>> -> memref<1x32xf32, #tpu.memory_space<vmem>>
    %62 = tpu.memref_slice %arg5[%c6_i32_37] : memref<16x!tpu.dma_semaphore, #tpu.memory_space<semaphore_mem>> -> memref<1x!tpu.dma_semaphore, #tpu.memory_space<semaphore_mem>>
    %63 = tpu.memref_squeeze %62 : memref<1x!tpu.dma_semaphore, #tpu.memory_space<semaphore_mem>> -> memref<!tpu.dma_semaphore, #tpu.memory_space<semaphore_mem>>
    tpu.enqueue_dma source(%60 : memref<1x32xf32, #tpu.memory_space<any>>) target(%61 : memref<1x32xf32, #tpu.memory_space<vmem>>) target_semaphore(%63 : memref<!tpu.dma_semaphore, #tpu.memory_space<semaphore_mem>>)
    %c7_i32 = arith.constant 7 : i32
    %64 = arith.addi %0, %c7_i32 : i32
    %65 = arith.index_cast %64 : i32 to index
    %66 = memref.load %arg1[%65] : memref<16xi32, #tpu.memory_space<smem>>
    %c0_i32_41 = arith.constant 0 : i32
    %67 = arith.maxsi %66, %c0_i32_41 : i32
    %c15_i32_42 = arith.constant 15 : i32
    %68 = arith.minsi %67, %c15_i32_42 : i32
    %c7_i32_43 = arith.constant 7 : i32
    %c0_i32_44 = arith.constant 0 : i32
    %69 = tpu.memref_slice %arg2[%68, %c0_i32_44] : memref<16x32xf32, #tpu.memory_space<any>> -> memref<1x32xf32, #tpu.memory_space<any>>
    %c7_i32_45 = arith.constant 7 : i32
    %c0_i32_46 = arith.constant 0 : i32
    %70 = tpu.memref_slice %arg4[%c7_i32_45, %c0_i32_46] : memref<16x32xf32, #tpu.memory_space<vmem>> -> memref<1x32xf32, #tpu.memory_space<vmem>>
    %71 = tpu.memref_slice %arg5[%c7_i32_43] : memref<16x!tpu.dma_semaphore, #tpu.memory_space<semaphore_mem>> -> memref<1x!tpu.dma_semaphore, #tpu.memory_space<semaphore_mem>>
    %72 = tpu.memref_squeeze %71 : memref<1x!tpu.dma_semaphore, #tpu.memory_space<semaphore_mem>> -> memref<!tpu.dma_semaphore, #tpu.memory_space<semaphore_mem>>
    tpu.enqueue_dma source(%69 : memref<1x32xf32, #tpu.memory_space<any>>) target(%70 : memref<1x32xf32, #tpu.memory_space<vmem>>) target_semaphore(%72 : memref<!tpu.dma_semaphore, #tpu.memory_space<semaphore_mem>>)
    %c8_i32 = arith.constant 8 : i32
    %73 = arith.addi %0, %c8_i32 : i32
    %74 = arith.index_cast %73 : i32 to index
    %75 = memref.load %arg1[%74] : memref<16xi32, #tpu.memory_space<smem>>
    %c0_i32_47 = arith.constant 0 : i32
    %76 = arith.maxsi %75, %c0_i32_47 : i32
    %c15_i32_48 = arith.constant 15 : i32
    %77 = arith.minsi %76, %c15_i32_48 : i32
    %c8_i32_49 = arith.constant 8 : i32
    %c0_i32_50 = arith.constant 0 : i32
    %78 = tpu.memref_slice %arg2[%77, %c0_i32_50] : memref<16x32xf32, #tpu.memory_space<any>> -> memref<1x32xf32, #tpu.memory_space<any>>
    %c8_i32_51 = arith.constant 8 : i32
    %c0_i32_52 = arith.constant 0 : i32
    %79 = tpu.memref_slice %arg4[%c8_i32_51, %c0_i32_52] : memref<16x32xf32, #tpu.memory_space<vmem>> -> memref<1x32xf32, #tpu.memory_space<vmem>>
    %80 = tpu.memref_slice %arg5[%c8_i32_49] : memref<16x!tpu.dma_semaphore, #tpu.memory_space<semaphore_mem>> -> memref<1x!tpu.dma_semaphore, #tpu.memory_space<semaphore_mem>>
    %81 = tpu.memref_squeeze %80 : memref<1x!tpu.dma_semaphore, #tpu.memory_space<semaphore_mem>> -> memref<!tpu.dma_semaphore, #tpu.memory_space<semaphore_mem>>
    tpu.enqueue_dma source(%78 : memref<1x32xf32, #tpu.memory_space<any>>) target(%79 : memref<1x32xf32, #tpu.memory_space<vmem>>) target_semaphore(%81 : memref<!tpu.dma_semaphore, #tpu.memory_space<semaphore_mem>>)
    %c9_i32 = arith.constant 9 : i32
    %82 = arith.addi %0, %c9_i32 : i32
    %83 = arith.index_cast %82 : i32 to index
    %84 = memref.load %arg1[%83] : memref<16xi32, #tpu.memory_space<smem>>
    %c0_i32_53 = arith.constant 0 : i32
    %85 = arith.maxsi %84, %c0_i32_53 : i32
    %c15_i32_54 = arith.constant 15 : i32
    %86 = arith.minsi %85, %c15_i32_54 : i32
    %c9_i32_55 = arith.constant 9 : i32
    %c0_i32_56 = arith.constant 0 : i32
    %87 = tpu.memref_slice %arg2[%86, %c0_i32_56] : memref<16x32xf32, #tpu.memory_space<any>> -> memref<1x32xf32, #tpu.memory_space<any>>
    %c9_i32_57 = arith.constant 9 : i32
    %c0_i32_58 = arith.constant 0 : i32
    %88 = tpu.memref_slice %arg4[%c9_i32_57, %c0_i32_58] : memref<16x32xf32, #tpu.memory_space<vmem>> -> memref<1x32xf32, #tpu.memory_space<vmem>>
    %89 = tpu.memref_slice %arg5[%c9_i32_55] : memref<16x!tpu.dma_semaphore, #tpu.memory_space<semaphore_mem>> -> memref<1x!tpu.dma_semaphore, #tpu.memory_space<semaphore_mem>>
    %90 = tpu.memref_squeeze %89 : memref<1x!tpu.dma_semaphore, #tpu.memory_space<semaphore_mem>> -> memref<!tpu.dma_semaphore, #tpu.memory_space<semaphore_mem>>
    tpu.enqueue_dma source(%87 : memref<1x32xf32, #tpu.memory_space<any>>) target(%88 : memref<1x32xf32, #tpu.memory_space<vmem>>) target_semaphore(%90 : memref<!tpu.dma_semaphore, #tpu.memory_space<semaphore_mem>>)
    %c10_i32 = arith.constant 10 : i32
    %91 = arith.addi %0, %c10_i32 : i32
    %92 = arith.index_cast %91 : i32 to index
    %93 = memref.load %arg1[%92] : memref<16xi32, #tpu.memory_space<smem>>
    %c0_i32_59 = arith.constant 0 : i32
    %94 = arith.maxsi %93, %c0_i32_59 : i32
    %c15_i32_60 = arith.constant 15 : i32
    %95 = arith.minsi %94, %c15_i32_60 : i32
    %c10_i32_61 = arith.constant 10 : i32
    %c0_i32_62 = arith.constant 0 : i32
    %96 = tpu.memref_slice %arg2[%95, %c0_i32_62] : memref<16x32xf32, #tpu.memory_space<any>> -> memref<1x32xf32, #tpu.memory_space<any>>
    %c10_i32_63 = arith.constant 10 : i32
    %c0_i32_64 = arith.constant 0 : i32
    %97 = tpu.memref_slice %arg4[%c10_i32_63, %c0_i32_64] : memref<16x32xf32, #tpu.memory_space<vmem>> -> memref<1x32xf32, #tpu.memory_space<vmem>>
    %98 = tpu.memref_slice %arg5[%c10_i32_61] : memref<16x!tpu.dma_semaphore, #tpu.memory_space<semaphore_mem>> -> memref<1x!tpu.dma_semaphore, #tpu.memory_space<semaphore_mem>>
    %99 = tpu.memref_squeeze %98 : memref<1x!tpu.dma_semaphore, #tpu.memory_space<semaphore_mem>> -> memref<!tpu.dma_semaphore, #tpu.memory_space<semaphore_mem>>
    tpu.enqueue_dma source(%96 : memref<1x32xf32, #tpu.memory_space<any>>) target(%97 : memref<1x32xf32, #tpu.memory_space<vmem>>) target_semaphore(%99 : memref<!tpu.dma_semaphore, #tpu.memory_space<semaphore_mem>>)
    %c11_i32 = arith.constant 11 : i32
    %100 = arith.addi %0, %c11_i32 : i32
    %101 = arith.index_cast %100 : i32 to index
    %102 = memref.load %arg1[%101] : memref<16xi32, #tpu.memory_space<smem>>
    %c0_i32_65 = arith.constant 0 : i32
    %103 = arith.maxsi %102, %c0_i32_65 : i32
    %c15_i32_66 = arith.constant 15 : i32
    %104 = arith.minsi %103, %c15_i32_66 : i32
    %c11_i32_67 = arith.constant 11 : i32
    %c0_i32_68 = arith.constant 0 : i32
    %105 = tpu.memref_slice %arg2[%104, %c0_i32_68] : memref<16x32xf32, #tpu.memory_space<any>> -> memref<1x32xf32, #tpu.memory_space<any>>
    %c11_i32_69 = arith.constant 11 : i32
    %c0_i32_70 = arith.constant 0 : i32
    %106 = tpu.memref_slice %arg4[%c11_i32_69, %c0_i32_70] : memref<16x32xf32, #tpu.memory_space<vmem>> -> memref<1x32xf32, #tpu.memory_space<vmem>>
    %107 = tpu.memref_slice %arg5[%c11_i32_67] : memref<16x!tpu.dma_semaphore, #tpu.memory_space<semaphore_mem>> -> memref<1x!tpu.dma_semaphore, #tpu.memory_space<semaphore_mem>>
    %108 = tpu.memref_squeeze %107 : memref<1x!tpu.dma_semaphore, #tpu.memory_space<semaphore_mem>> -> memref<!tpu.dma_semaphore, #tpu.memory_space<semaphore_mem>>
    tpu.enqueue_dma source(%105 : memref<1x32xf32, #tpu.memory_space<any>>) target(%106 : memref<1x32xf32, #tpu.memory_space<vmem>>) target_semaphore(%108 : memref<!tpu.dma_semaphore, #tpu.memory_space<semaphore_mem>>)
    %c12_i32 = arith.constant 12 : i32
    %109 = arith.addi %0, %c12_i32 : i32
    %110 = arith.index_cast %109 : i32 to index
    %111 = memref.load %arg1[%110] : memref<16xi32, #tpu.memory_space<smem>>
    %c0_i32_71 = arith.constant 0 : i32
    %112 = arith.maxsi %111, %c0_i32_71 : i32
    %c15_i32_72 = arith.constant 15 : i32
    %113 = arith.minsi %112, %c15_i32_72 : i32
    %c12_i32_73 = arith.constant 12 : i32
    %c0_i32_74 = arith.constant 0 : i32
    %114 = tpu.memref_slice %arg2[%113, %c0_i32_74] : memref<16x32xf32, #tpu.memory_space<any>> -> memref<1x32xf32, #tpu.memory_space<any>>
    %c12_i32_75 = arith.constant 12 : i32
    %c0_i32_76 = arith.constant 0 : i32
    %115 = tpu.memref_slice %arg4[%c12_i32_75, %c0_i32_76] : memref<16x32xf32, #tpu.memory_space<vmem>> -> memref<1x32xf32, #tpu.memory_space<vmem>>
    %116 = tpu.memref_slice %arg5[%c12_i32_73] : memref<16x!tpu.dma_semaphore, #tpu.memory_space<semaphore_mem>> -> memref<1x!tpu.dma_semaphore, #tpu.memory_space<semaphore_mem>>
    %117 = tpu.memref_squeeze %116 : memref<1x!tpu.dma_semaphore, #tpu.memory_space<semaphore_mem>> -> memref<!tpu.dma_semaphore, #tpu.memory_space<semaphore_mem>>
    tpu.enqueue_dma source(%114 : memref<1x32xf32, #tpu.memory_space<any>>) target(%115 : memref<1x32xf32, #tpu.memory_space<vmem>>) target_semaphore(%117 : memref<!tpu.dma_semaphore, #tpu.memory_space<semaphore_mem>>)
    %c13_i32 = arith.constant 13 : i32
    %118 = arith.addi %0, %c13_i32 : i32
    %119 = arith.index_cast %118 : i32 to index
    %120 = memref.load %arg1[%119] : memref<16xi32, #tpu.memory_space<smem>>
    %c0_i32_77 = arith.constant 0 : i32
    %121 = arith.maxsi %120, %c0_i32_77 : i32
    %c15_i32_78 = arith.constant 15 : i32
    %122 = arith.minsi %121, %c15_i32_78 : i32
    %c13_i32_79 = arith.constant 13 : i32
    %c0_i32_80 = arith.constant 0 : i32
    %123 = tpu.memref_slice %arg2[%122, %c0_i32_80] : memref<16x32xf32, #tpu.memory_space<any>> -> memref<1x32xf32, #tpu.memory_space<any>>
    %c13_i32_81 = arith.constant 13 : i32
    %c0_i32_82 = arith.constant 0 : i32
    %124 = tpu.memref_slice %arg4[%c13_i32_81, %c0_i32_82] : memref<16x32xf32, #tpu.memory_space<vmem>> -> memref<1x32xf32, #tpu.memory_space<vmem>>
    %125 = tpu.memref_slice %arg5[%c13_i32_79] : memref<16x!tpu.dma_semaphore, #tpu.memory_space<semaphore_mem>> -> memref<1x!tpu.dma_semaphore, #tpu.memory_space<semaphore_mem>>
    %126 = tpu.memref_squeeze %125 : memref<1x!tpu.dma_semaphore, #tpu.memory_space<semaphore_mem>> -> memref<!tpu.dma_semaphore, #tpu.memory_space<semaphore_mem>>
    tpu.enqueue_dma source(%123 : memref<1x32xf32, #tpu.memory_space<any>>) target(%124 : memref<1x32xf32, #tpu.memory_space<vmem>>) target_semaphore(%126 : memref<!tpu.dma_semaphore, #tpu.memory_space<semaphore_mem>>)
    %c14_i32 = arith.constant 14 : i32
    %127 = arith.addi %0, %c14_i32 : i32
    %128 = arith.index_cast %127 : i32 to index
    %129 = memref.load %arg1[%128] : memref<16xi32, #tpu.memory_space<smem>>
    %c0_i32_83 = arith.constant 0 : i32
    %130 = arith.maxsi %129, %c0_i32_83 : i32
    %c15_i32_84 = arith.constant 15 : i32
    %131 = arith.minsi %130, %c15_i32_84 : i32
    %c14_i32_85 = arith.constant 14 : i32
    %c0_i32_86 = arith.constant 0 : i32
    %132 = tpu.memref_slice %arg2[%131, %c0_i32_86] : memref<16x32xf32, #tpu.memory_space<any>> -> memref<1x32xf32, #tpu.memory_space<any>>
    %c14_i32_87 = arith.constant 14 : i32
    %c0_i32_88 = arith.constant 0 : i32
    %133 = tpu.memref_slice %arg4[%c14_i32_87, %c0_i32_88] : memref<16x32xf32, #tpu.memory_space<vmem>> -> memref<1x32xf32, #tpu.memory_space<vmem>>
    %134 = tpu.memref_slice %arg5[%c14_i32_85] : memref<16x!tpu.dma_semaphore, #tpu.memory_space<semaphore_mem>> -> memref<1x!tpu.dma_semaphore, #tpu.memory_space<semaphore_mem>>
    %135 = tpu.memref_squeeze %134 : memref<1x!tpu.dma_semaphore, #tpu.memory_space<semaphore_mem>> -> memref<!tpu.dma_semaphore, #tpu.memory_space<semaphore_mem>>
    tpu.enqueue_dma source(%132 : memref<1x32xf32, #tpu.memory_space<any>>) target(%133 : memref<1x32xf32, #tpu.memory_space<vmem>>) target_semaphore(%135 : memref<!tpu.dma_semaphore, #tpu.memory_space<semaphore_mem>>)
    %c15_i32_89 = arith.constant 15 : i32
    %136 = arith.addi %0, %c15_i32_89 : i32
    %137 = arith.index_cast %136 : i32 to index
    %138 = memref.load %arg1[%137] : memref<16xi32, #tpu.memory_space<smem>>
    %c0_i32_90 = arith.constant 0 : i32
    %139 = arith.maxsi %138, %c0_i32_90 : i32
    %c15_i32_91 = arith.constant 15 : i32
    %140 = arith.minsi %139, %c15_i32_91 : i32
    %c15_i32_92 = arith.constant 15 : i32
    %c0_i32_93 = arith.constant 0 : i32
    %141 = tpu.memref_slice %arg2[%140, %c0_i32_93] : memref<16x32xf32, #tpu.memory_space<any>> -> memref<1x32xf32, #tpu.memory_space<any>>
    %c15_i32_94 = arith.constant 15 : i32
    %c0_i32_95 = arith.constant 0 : i32
    %142 = tpu.memref_slice %arg4[%c15_i32_94, %c0_i32_95] : memref<16x32xf32, #tpu.memory_space<vmem>> -> memref<1x32xf32, #tpu.memory_space<vmem>>
    %143 = tpu.memref_slice %arg5[%c15_i32_92] : memref<16x!tpu.dma_semaphore, #tpu.memory_space<semaphore_mem>> -> memref<1x!tpu.dma_semaphore, #tpu.memory_space<semaphore_mem>>
    %144 = tpu.memref_squeeze %143 : memref<1x!tpu.dma_semaphore, #tpu.memory_space<semaphore_mem>> -> memref<!tpu.dma_semaphore, #tpu.memory_space<semaphore_mem>>
    tpu.enqueue_dma source(%141 : memref<1x32xf32, #tpu.memory_space<any>>) target(%142 : memref<1x32xf32, #tpu.memory_space<vmem>>) target_semaphore(%144 : memref<!tpu.dma_semaphore, #tpu.memory_space<semaphore_mem>>)
    %c0_i32_96 = arith.constant 0 : i32
    %c0_i32_97 = arith.constant 0 : i32
    %145 = tpu.memref_slice %arg2[%5, %c0_i32_97] : memref<16x32xf32, #tpu.memory_space<any>> -> memref<1x32xf32, #tpu.memory_space<any>>
    %c0_i32_98 = arith.constant 0 : i32
    %c0_i32_99 = arith.constant 0 : i32
    %146 = tpu.memref_slice %arg4[%c0_i32_98, %c0_i32_99] : memref<16x32xf32, #tpu.memory_space<vmem>> -> memref<1x32xf32, #tpu.memory_space<vmem>>
    %147 = tpu.memref_slice %arg5[%c0_i32_96] : memref<16x!tpu.dma_semaphore, #tpu.memory_space<semaphore_mem>> -> memref<1x!tpu.dma_semaphore, #tpu.memory_space<semaphore_mem>>
    %148 = tpu.memref_squeeze %147 : memref<1x!tpu.dma_semaphore, #tpu.memory_space<semaphore_mem>> -> memref<!tpu.dma_semaphore, #tpu.memory_space<semaphore_mem>>
    tpu.wait_dma2 semaphore(%148 : memref<!tpu.dma_semaphore, #tpu.memory_space<semaphore_mem>>) src(%145 : memref<1x32xf32, #tpu.memory_space<any>>) dst(%146 : memref<1x32xf32, #tpu.memory_space<vmem>>)
    %c1_i32_100 = arith.constant 1 : i32
    %c0_i32_101 = arith.constant 0 : i32
    %149 = tpu.memref_slice %arg2[%14, %c0_i32_101] : memref<16x32xf32, #tpu.memory_space<any>> -> memref<1x32xf32, #tpu.memory_space<any>>
    %c1_i32_102 = arith.constant 1 : i32
    %c0_i32_103 = arith.constant 0 : i32
    %150 = tpu.memref_slice %arg4[%c1_i32_102, %c0_i32_103] : memref<16x32xf32, #tpu.memory_space<vmem>> -> memref<1x32xf32, #tpu.memory_space<vmem>>
    %151 = tpu.memref_slice %arg5[%c1_i32_100] : memref<16x!tpu.dma_semaphore, #tpu.memory_space<semaphore_mem>> -> memref<1x!tpu.dma_semaphore, #tpu.memory_space<semaphore_mem>>
    %152 = tpu.memref_squeeze %151 : memref<1x!tpu.dma_semaphore, #tpu.memory_space<semaphore_mem>> -> memref<!tpu.dma_semaphore, #tpu.memory_space<semaphore_mem>>
    tpu.wait_dma2 semaphore(%152 : memref<!tpu.dma_semaphore, #tpu.memory_space<semaphore_mem>>) src(%149 : memref<1x32xf32, #tpu.memory_space<any>>) dst(%150 : memref<1x32xf32, #tpu.memory_space<vmem>>)
    %c2_i32_104 = arith.constant 2 : i32
    %c0_i32_105 = arith.constant 0 : i32
    %153 = tpu.memref_slice %arg2[%23, %c0_i32_105] : memref<16x32xf32, #tpu.memory_space<any>> -> memref<1x32xf32, #tpu.memory_space<any>>
    %c2_i32_106 = arith.constant 2 : i32
    %c0_i32_107 = arith.constant 0 : i32
    %154 = tpu.memref_slice %arg4[%c2_i32_106, %c0_i32_107] : memref<16x32xf32, #tpu.memory_space<vmem>> -> memref<1x32xf32, #tpu.memory_space<vmem>>
    %155 = tpu.memref_slice %arg5[%c2_i32_104] : memref<16x!tpu.dma_semaphore, #tpu.memory_space<semaphore_mem>> -> memref<1x!tpu.dma_semaphore, #tpu.memory_space<semaphore_mem>>
    %156 = tpu.memref_squeeze %155 : memref<1x!tpu.dma_semaphore, #tpu.memory_space<semaphore_mem>> -> memref<!tpu.dma_semaphore, #tpu.memory_space<semaphore_mem>>
    tpu.wait_dma2 semaphore(%156 : memref<!tpu.dma_semaphore, #tpu.memory_space<semaphore_mem>>) src(%153 : memref<1x32xf32, #tpu.memory_space<any>>) dst(%154 : memref<1x32xf32, #tpu.memory_space<vmem>>)
    %c3_i32_108 = arith.constant 3 : i32
    %c0_i32_109 = arith.constant 0 : i32
    %157 = tpu.memref_slice %arg2[%32, %c0_i32_109] : memref<16x32xf32, #tpu.memory_space<any>> -> memref<1x32xf32, #tpu.memory_space<any>>
    %c3_i32_110 = arith.constant 3 : i32
    %c0_i32_111 = arith.constant 0 : i32
    %158 = tpu.memref_slice %arg4[%c3_i32_110, %c0_i32_111] : memref<16x32xf32, #tpu.memory_space<vmem>> -> memref<1x32xf32, #tpu.memory_space<vmem>>
    %159 = tpu.memref_slice %arg5[%c3_i32_108] : memref<16x!tpu.dma_semaphore, #tpu.memory_space<semaphore_mem>> -> memref<1x!tpu.dma_semaphore, #tpu.memory_space<semaphore_mem>>
    %160 = tpu.memref_squeeze %159 : memref<1x!tpu.dma_semaphore, #tpu.memory_space<semaphore_mem>> -> memref<!tpu.dma_semaphore, #tpu.memory_space<semaphore_mem>>
    tpu.wait_dma2 semaphore(%160 : memref<!tpu.dma_semaphore, #tpu.memory_space<semaphore_mem>>) src(%157 : memref<1x32xf32, #tpu.memory_space<any>>) dst(%158 : memref<1x32xf32, #tpu.memory_space<vmem>>)
    %c4_i32_112 = arith.constant 4 : i32
    %c0_i32_113 = arith.constant 0 : i32
    %161 = tpu.memref_slice %arg2[%41, %c0_i32_113] : memref<16x32xf32, #tpu.memory_space<any>> -> memref<1x32xf32, #tpu.memory_space<any>>
    %c4_i32_114 = arith.constant 4 : i32
    %c0_i32_115 = arith.constant 0 : i32
    %162 = tpu.memref_slice %arg4[%c4_i32_114, %c0_i32_115] : memref<16x32xf32, #tpu.memory_space<vmem>> -> memref<1x32xf32, #tpu.memory_space<vmem>>
    %163 = tpu.memref_slice %arg5[%c4_i32_112] : memref<16x!tpu.dma_semaphore, #tpu.memory_space<semaphore_mem>> -> memref<1x!tpu.dma_semaphore, #tpu.memory_space<semaphore_mem>>
    %164 = tpu.memref_squeeze %163 : memref<1x!tpu.dma_semaphore, #tpu.memory_space<semaphore_mem>> -> memref<!tpu.dma_semaphore, #tpu.memory_space<semaphore_mem>>
    tpu.wait_dma2 semaphore(%164 : memref<!tpu.dma_semaphore, #tpu.memory_space<semaphore_mem>>) src(%161 : memref<1x32xf32, #tpu.memory_space<any>>) dst(%162 : memref<1x32xf32, #tpu.memory_space<vmem>>)
    %c5_i32_116 = arith.constant 5 : i32
    %c0_i32_117 = arith.constant 0 : i32
    %165 = tpu.memref_slice %arg2[%50, %c0_i32_117] : memref<16x32xf32, #tpu.memory_space<any>> -> memref<1x32xf32, #tpu.memory_space<any>>
    %c5_i32_118 = arith.constant 5 : i32
    %c0_i32_119 = arith.constant 0 : i32
    %166 = tpu.memref_slice %arg4[%c5_i32_118, %c0_i32_119] : memref<16x32xf32, #tpu.memory_space<vmem>> -> memref<1x32xf32, #tpu.memory_space<vmem>>
    %167 = tpu.memref_slice %arg5[%c5_i32_116] : memref<16x!tpu.dma_semaphore, #tpu.memory_space<semaphore_mem>> -> memref<1x!tpu.dma_semaphore, #tpu.memory_space<semaphore_mem>>
    %168 = tpu.memref_squeeze %167 : memref<1x!tpu.dma_semaphore, #tpu.memory_space<semaphore_mem>> -> memref<!tpu.dma_semaphore, #tpu.memory_space<semaphore_mem>>
    tpu.wait_dma2 semaphore(%168 : memref<!tpu.dma_semaphore, #tpu.memory_space<semaphore_mem>>) src(%165 : memref<1x32xf32, #tpu.memory_space<any>>) dst(%166 : memref<1x32xf32, #tpu.memory_space<vmem>>)
    %c6_i32_120 = arith.constant 6 : i32
    %c0_i32_121 = arith.constant 0 : i32
    %169 = tpu.memref_slice %arg2[%59, %c0_i32_121] : memref<16x32xf32, #tpu.memory_space<any>> -> memref<1x32xf32, #tpu.memory_space<any>>
    %c6_i32_122 = arith.constant 6 : i32
    %c0_i32_123 = arith.constant 0 : i32
    %170 = tpu.memref_slice %arg4[%c6_i32_122, %c0_i32_123] : memref<16x32xf32, #tpu.memory_space<vmem>> -> memref<1x32xf32, #tpu.memory_space<vmem>>
    %171 = tpu.memref_slice %arg5[%c6_i32_120] : memref<16x!tpu.dma_semaphore, #tpu.memory_space<semaphore_mem>> -> memref<1x!tpu.dma_semaphore, #tpu.memory_space<semaphore_mem>>
    %172 = tpu.memref_squeeze %171 : memref<1x!tpu.dma_semaphore, #tpu.memory_space<semaphore_mem>> -> memref<!tpu.dma_semaphore, #tpu.memory_space<semaphore_mem>>
    tpu.wait_dma2 semaphore(%172 : memref<!tpu.dma_semaphore, #tpu.memory_space<semaphore_mem>>) src(%169 : memref<1x32xf32, #tpu.memory_space<any>>) dst(%170 : memref<1x32xf32, #tpu.memory_space<vmem>>)
    %c7_i32_124 = arith.constant 7 : i32
    %c0_i32_125 = arith.constant 0 : i32
    %173 = tpu.memref_slice %arg2[%68, %c0_i32_125] : memref<16x32xf32, #tpu.memory_space<any>> -> memref<1x32xf32, #tpu.memory_space<any>>
    %c7_i32_126 = arith.constant 7 : i32
    %c0_i32_127 = arith.constant 0 : i32
    %174 = tpu.memref_slice %arg4[%c7_i32_126, %c0_i32_127] : memref<16x32xf32, #tpu.memory_space<vmem>> -> memref<1x32xf32, #tpu.memory_space<vmem>>
    %175 = tpu.memref_slice %arg5[%c7_i32_124] : memref<16x!tpu.dma_semaphore, #tpu.memory_space<semaphore_mem>> -> memref<1x!tpu.dma_semaphore, #tpu.memory_space<semaphore_mem>>
    %176 = tpu.memref_squeeze %175 : memref<1x!tpu.dma_semaphore, #tpu.memory_space<semaphore_mem>> -> memref<!tpu.dma_semaphore, #tpu.memory_space<semaphore_mem>>
    tpu.wait_dma2 semaphore(%176 : memref<!tpu.dma_semaphore, #tpu.memory_space<semaphore_mem>>) src(%173 : memref<1x32xf32, #tpu.memory_space<any>>) dst(%174 : memref<1x32xf32, #tpu.memory_space<vmem>>)
    %c8_i32_128 = arith.constant 8 : i32
    %c0_i32_129 = arith.constant 0 : i32
    %177 = tpu.memref_slice %arg2[%77, %c0_i32_129] : memref<16x32xf32, #tpu.memory_space<any>> -> memref<1x32xf32, #tpu.memory_space<any>>
    %c8_i32_130 = arith.constant 8 : i32
    %c0_i32_131 = arith.constant 0 : i32
    %178 = tpu.memref_slice %arg4[%c8_i32_130, %c0_i32_131] : memref<16x32xf32, #tpu.memory_space<vmem>> -> memref<1x32xf32, #tpu.memory_space<vmem>>
    %179 = tpu.memref_slice %arg5[%c8_i32_128] : memref<16x!tpu.dma_semaphore, #tpu.memory_space<semaphore_mem>> -> memref<1x!tpu.dma_semaphore, #tpu.memory_space<semaphore_mem>>
    %180 = tpu.memref_squeeze %179 : memref<1x!tpu.dma_semaphore, #tpu.memory_space<semaphore_mem>> -> memref<!tpu.dma_semaphore, #tpu.memory_space<semaphore_mem>>
    tpu.wait_dma2 semaphore(%180 : memref<!tpu.dma_semaphore, #tpu.memory_space<semaphore_mem>>) src(%177 : memref<1x32xf32, #tpu.memory_space<any>>) dst(%178 : memref<1x32xf32, #tpu.memory_space<vmem>>)
    %c9_i32_132 = arith.constant 9 : i32
    %c0_i32_133 = arith.constant 0 : i32
    %181 = tpu.memref_slice %arg2[%86, %c0_i32_133] : memref<16x32xf32, #tpu.memory_space<any>> -> memref<1x32xf32, #tpu.memory_space<any>>
    %c9_i32_134 = arith.constant 9 : i32
    %c0_i32_135 = arith.constant 0 : i32
    %182 = tpu.memref_slice %arg4[%c9_i32_134, %c0_i32_135] : memref<16x32xf32, #tpu.memory_space<vmem>> -> memref<1x32xf32, #tpu.memory_space<vmem>>
    %183 = tpu.memref_slice %arg5[%c9_i32_132] : memref<16x!tpu.dma_semaphore, #tpu.memory_space<semaphore_mem>> -> memref<1x!tpu.dma_semaphore, #tpu.memory_space<semaphore_mem>>
    %184 = tpu.memref_squeeze %183 : memref<1x!tpu.dma_semaphore, #tpu.memory_space<semaphore_mem>> -> memref<!tpu.dma_semaphore, #tpu.memory_space<semaphore_mem>>
    tpu.wait_dma2 semaphore(%184 : memref<!tpu.dma_semaphore, #tpu.memory_space<semaphore_mem>>) src(%181 : memref<1x32xf32, #tpu.memory_space<any>>) dst(%182 : memref<1x32xf32, #tpu.memory_space<vmem>>)
    %c10_i32_136 = arith.constant 10 : i32
    %c0_i32_137 = arith.constant 0 : i32
    %185 = tpu.memref_slice %arg2[%95, %c0_i32_137] : memref<16x32xf32, #tpu.memory_space<any>> -> memref<1x32xf32, #tpu.memory_space<any>>
    %c10_i32_138 = arith.constant 10 : i32
    %c0_i32_139 = arith.constant 0 : i32
    %186 = tpu.memref_slice %arg4[%c10_i32_138, %c0_i32_139] : memref<16x32xf32, #tpu.memory_space<vmem>> -> memref<1x32xf32, #tpu.memory_space<vmem>>
    %187 = tpu.memref_slice %arg5[%c10_i32_136] : memref<16x!tpu.dma_semaphore, #tpu.memory_space<semaphore_mem>> -> memref<1x!tpu.dma_semaphore, #tpu.memory_space<semaphore_mem>>
    %188 = tpu.memref_squeeze %187 : memref<1x!tpu.dma_semaphore, #tpu.memory_space<semaphore_mem>> -> memref<!tpu.dma_semaphore, #tpu.memory_space<semaphore_mem>>
    tpu.wait_dma2 semaphore(%188 : memref<!tpu.dma_semaphore, #tpu.memory_space<semaphore_mem>>) src(%185 : memref<1x32xf32, #tpu.memory_space<any>>) dst(%186 : memref<1x32xf32, #tpu.memory_space<vmem>>)
    %c11_i32_140 = arith.constant 11 : i32
    %c0_i32_141 = arith.constant 0 : i32
    %189 = tpu.memref_slice %arg2[%104, %c0_i32_141] : memref<16x32xf32, #tpu.memory_space<any>> -> memref<1x32xf32, #tpu.memory_space<any>>
    %c11_i32_142 = arith.constant 11 : i32
    %c0_i32_143 = arith.constant 0 : i32
    %190 = tpu.memref_slice %arg4[%c11_i32_142, %c0_i32_143] : memref<16x32xf32, #tpu.memory_space<vmem>> -> memref<1x32xf32, #tpu.memory_space<vmem>>
    %191 = tpu.memref_slice %arg5[%c11_i32_140] : memref<16x!tpu.dma_semaphore, #tpu.memory_space<semaphore_mem>> -> memref<1x!tpu.dma_semaphore, #tpu.memory_space<semaphore_mem>>
    %192 = tpu.memref_squeeze %191 : memref<1x!tpu.dma_semaphore, #tpu.memory_space<semaphore_mem>> -> memref<!tpu.dma_semaphore, #tpu.memory_space<semaphore_mem>>
    tpu.wait_dma2 semaphore(%192 : memref<!tpu.dma_semaphore, #tpu.memory_space<semaphore_mem>>) src(%189 : memref<1x32xf32, #tpu.memory_space<any>>) dst(%190 : memref<1x32xf32, #tpu.memory_space<vmem>>)
    %c12_i32_144 = arith.constant 12 : i32
    %c0_i32_145 = arith.constant 0 : i32
    %193 = tpu.memref_slice %arg2[%113, %c0_i32_145] : memref<16x32xf32, #tpu.memory_space<any>> -> memref<1x32xf32, #tpu.memory_space<any>>
    %c12_i32_146 = arith.constant 12 : i32
    %c0_i32_147 = arith.constant 0 : i32
    %194 = tpu.memref_slice %arg4[%c12_i32_146, %c0_i32_147] : memref<16x32xf32, #tpu.memory_space<vmem>> -> memref<1x32xf32, #tpu.memory_space<vmem>>
    %195 = tpu.memref_slice %arg5[%c12_i32_144] : memref<16x!tpu.dma_semaphore, #tpu.memory_space<semaphore_mem>> -> memref<1x!tpu.dma_semaphore, #tpu.memory_space<semaphore_mem>>
    %196 = tpu.memref_squeeze %195 : memref<1x!tpu.dma_semaphore, #tpu.memory_space<semaphore_mem>> -> memref<!tpu.dma_semaphore, #tpu.memory_space<semaphore_mem>>
    tpu.wait_dma2 semaphore(%196 : memref<!tpu.dma_semaphore, #tpu.memory_space<semaphore_mem>>) src(%193 : memref<1x32xf32, #tpu.memory_space<any>>) dst(%194 : memref<1x32xf32, #tpu.memory_space<vmem>>)
    %c13_i32_148 = arith.constant 13 : i32
    %c0_i32_149 = arith.constant 0 : i32
    %197 = tpu.memref_slice %arg2[%122, %c0_i32_149] : memref<16x32xf32, #tpu.memory_space<any>> -> memref<1x32xf32, #tpu.memory_space<any>>
    %c13_i32_150 = arith.constant 13 : i32
    %c0_i32_151 = arith.constant 0 : i32
    %198 = tpu.memref_slice %arg4[%c13_i32_150, %c0_i32_151] : memref<16x32xf32, #tpu.memory_space<vmem>> -> memref<1x32xf32, #tpu.memory_space<vmem>>
    %199 = tpu.memref_slice %arg5[%c13_i32_148] : memref<16x!tpu.dma_semaphore, #tpu.memory_space<semaphore_mem>> -> memref<1x!tpu.dma_semaphore, #tpu.memory_space<semaphore_mem>>
    %200 = tpu.memref_squeeze %199 : memref<1x!tpu.dma_semaphore, #tpu.memory_space<semaphore_mem>> -> memref<!tpu.dma_semaphore, #tpu.memory_space<semaphore_mem>>
    tpu.wait_dma2 semaphore(%200 : memref<!tpu.dma_semaphore, #tpu.memory_space<semaphore_mem>>) src(%197 : memref<1x32xf32, #tpu.memory_space<any>>) dst(%198 : memref<1x32xf32, #tpu.memory_space<vmem>>)
    %c14_i32_152 = arith.constant 14 : i32
    %c0_i32_153 = arith.constant 0 : i32
    %201 = tpu.memref_slice %arg2[%131, %c0_i32_153] : memref<16x32xf32, #tpu.memory_space<any>> -> memref<1x32xf32, #tpu.memory_space<any>>
    %c14_i32_154 = arith.constant 14 : i32
    %c0_i32_155 = arith.constant 0 : i32
    %202 = tpu.memref_slice %arg4[%c14_i32_154, %c0_i32_155] : memref<16x32xf32, #tpu.memory_space<vmem>> -> memref<1x32xf32, #tpu.memory_space<vmem>>
    %203 = tpu.memref_slice %arg5[%c14_i32_152] : memref<16x!tpu.dma_semaphore, #tpu.memory_space<semaphore_mem>> -> memref<1x!tpu.dma_semaphore, #tpu.memory_space<semaphore_mem>>
    %204 = tpu.memref_squeeze %203 : memref<1x!tpu.dma_semaphore, #tpu.memory_space<semaphore_mem>> -> memref<!tpu.dma_semaphore, #tpu.memory_space<semaphore_mem>>
    tpu.wait_dma2 semaphore(%204 : memref<!tpu.dma_semaphore, #tpu.memory_space<semaphore_mem>>) src(%201 : memref<1x32xf32, #tpu.memory_space<any>>) dst(%202 : memref<1x32xf32, #tpu.memory_space<vmem>>)
    %c15_i32_156 = arith.constant 15 : i32
    %c0_i32_157 = arith.constant 0 : i32
    %205 = tpu.memref_slice %arg2[%140, %c0_i32_157] : memref<16x32xf32, #tpu.memory_space<any>> -> memref<1x32xf32, #tpu.memory_space<any>>
    %c15_i32_158 = arith.constant 15 : i32
    %c0_i32_159 = arith.constant 0 : i32
    %206 = tpu.memref_slice %arg4[%c15_i32_158, %c0_i32_159] : memref<16x32xf32, #tpu.memory_space<vmem>> -> memref<1x32xf32, #tpu.memory_space<vmem>>
    %207 = tpu.memref_slice %arg5[%c15_i32_156] : memref<16x!tpu.dma_semaphore, #tpu.memory_space<semaphore_mem>> -> memref<1x!tpu.dma_semaphore, #tpu.memory_space<semaphore_mem>>
    %208 = tpu.memref_squeeze %207 : memref<1x!tpu.dma_semaphore, #tpu.memory_space<semaphore_mem>> -> memref<!tpu.dma_semaphore, #tpu.memory_space<semaphore_mem>>
    tpu.wait_dma2 semaphore(%208 : memref<!tpu.dma_semaphore, #tpu.memory_space<semaphore_mem>>) src(%205 : memref<1x32xf32, #tpu.memory_space<any>>) dst(%206 : memref<1x32xf32, #tpu.memory_space<vmem>>)
    %c0 = arith.constant 0 : index
    %c0_160 = arith.constant 0 : index
    %209 = vector.load %arg4[%c0, %c0_160] : memref<16x32xf32, #tpu.memory_space<vmem>>, vector<16x32xf32>
    %c0_161 = arith.constant 0 : index
    %c0_162 = arith.constant 0 : index
    %210 = vector.load %arg3[%c0_161, %c0_162] : memref<16x32xf32, #tpu.memory_space<vmem>>, vector<16x32xf32>
    tpu.vector_store %arg3[%c0_161, %c0_162], %209 {strides = array<i32>} : memref<16x32xf32, #tpu.memory_space<vmem>>, vector<16x32xf32>,
    return
  }
  func.func @transform_1(%arg0: i32, %arg1: memref<16xi32, #tpu.memory_space<smem>>) -> (i32, i32) {
    %c0_i32 = arith.constant 0 : i32
    %c0_i32_0 = arith.constant 0 : i32
    return %arg0, %c0_i32 : i32, i32
  }
}

</mosaic_0001>

<llo_original>
// kernel: tpu_custom_call.1
$region0: #{tpu_custom_call.1}
  #allocation0 [shape = 'u32[]', space=smem, size = 0x4, offset = 0x4, fixed_abs, tag = 'smem constant byte address 0x4 - core index']
  #allocation1 [shape = 'u32[72,128]{1,0:T(1,128)}', space=vmem, size = 0x9000, scoped, tag = 'internal scratch']
  #allocation2 [shape = 'f32[16,32]{1,0:T(8,128)}', space=vmem, size = 0x2000, scoped, tag = 'scratch operand']
  #allocation3 [shape = 's32[16]{0}', space=sflag, size = 0x40, scoped, tag = 'scratch operand']
  #allocation4 [shape = 's32[1]{0}', space=sflag, size = 0x4, scoped, tag = 'scoped memory for tpu_custom_call.1']
  #allocation5 [shape = 'u8[512]{0}', space=smem, size = 0x200, scoped, tag = 'prefetched SMEM operand 0']
  #allocation8 [shape = 's32[]', space=sflag, size = 0x4, offset = 0, fixed_abs, tag = 'sflag constant byte address 0x0 - dummy sync flag']
  #allocation9 [shape = 's32[]', space=sflag, size = 0x4, offset = 0, fixed_abs, tag = 'sflag constant byte address 0x0 - dummy sync flag']
  #allocation10 [shape = 'u32[]', space=smem, size = 0x4, offset = 0x44, fixed_abs, tag = 'smem constant byte address 0x44 - assertion arg 0']
  #allocation11 [shape = 'u32[]', space=smem, size = 0x4, offset = 0x48, fixed_abs, tag = 'smem constant byte address 0x48 - assertion arg 1']
  #allocation12 [shape = 's32[]', space=sflag, size = 0x4, offset = 0, fixed_abs, tag = 'sflag constant byte address 0x0 - dummy sync flag']
  #allocation13 [shape = 's32[]', space=sflag, size = 0x4, offset = 0, fixed_abs, tag = 'sflag constant byte address 0x0 - dummy sync flag']
  #allocation14 [shape = 's32[]', space=sflag, size = 0x4, offset = 0, fixed_abs, tag = 'sflag constant byte address 0x0 - dummy sync flag']
  #allocation15 [shape = 's32[]', space=sflag, size = 0x4, offset = 0, fixed_abs, tag = 'sflag constant byte address 0x0 - dummy sync flag']
  #allocation16 [shape = 's32[]', space=sflag, size = 0x4, offset = 0, fixed_abs, tag = 'sflag constant byte address 0x0 - dummy sync flag']
  #allocation17 [shape = 's32[]', space=sflag, size = 0x4, offset = 0, fixed_abs, tag = 'sflag constant byte address 0x0 - dummy sync flag']
  #allocation18 [shape = 's32[]', space=sflag, size = 0x4, offset = 0, fixed_abs, tag = 'sflag constant byte address 0x0 - dummy sync flag']
  #allocation19 [shape = 's32[]', space=sflag, size = 0x4, offset = 0, fixed_abs, tag = 'sflag constant byte address 0x0 - dummy sync flag']
  #allocation20 [shape = 's32[]', space=sflag, size = 0x4, offset = 0, fixed_abs, tag = 'sflag constant byte address 0x0 - dummy sync flag']
  #allocation21 [shape = 's32[]', space=sflag, size = 0x4, offset = 0, fixed_abs, tag = 'sflag constant byte address 0x0 - dummy sync flag']
  #allocation22 [shape = 's32[]', space=sflag, size = 0x4, offset = 0, fixed_abs, tag = 'sflag constant byte address 0x0 - dummy sync flag']
  #allocation23 [shape = 's32[]', space=sflag, size = 0x4, offset = 0, fixed_abs, tag = 'sflag constant byte address 0x0 - dummy sync flag']
  #allocation24 [shape = 's32[]', space=sflag, size = 0x4, offset = 0, fixed_abs, tag = 'sflag constant byte address 0x0 - dummy sync flag']
  #allocation25 [shape = 's32[]', space=sflag, size = 0x4, offset = 0, fixed_abs, tag = 'sflag constant byte address 0x0 - dummy sync flag']
  #allocation26 [shape = 's32[]', space=sflag, size = 0x4, offset = 0, fixed_abs, tag = 'sflag constant byte address 0x0 - dummy sync flag']
  #allocation27 [shape = 's32[]', space=sflag, size = 0x4, offset = 0, fixed_abs, tag = 'sflag constant byte address 0x0 - dummy sync flag']
  #allocation28 [shape = 's32[]', space=sflag, size = 0x4, offset = 0, fixed_abs, tag = 'sflag constant byte address 0x0 - dummy sync flag']
  #allocation29 [shape = 's32[]', space=sflag, size = 0x4, offset = 0, fixed_abs, tag = 'sflag constant byte address 0x0 - dummy sync flag']
  #allocation30 [shape = 's32[]', space=sflag, size = 0x4, offset = 0, fixed_abs, tag = 'sflag constant byte address 0x0 - dummy sync flag']
  #allocation31 [shape = 's32[]', space=sflag, size = 0x4, offset = 0, fixed_abs, tag = 'sflag constant byte address 0x0 - dummy sync flag']
  #allocation32 [shape = 's32[]', space=sflag, size = 0x4, offset = 0, fixed_abs, tag = 'sflag constant byte address 0x0 - dummy sync flag']
  #allocation33 [shape = 's32[]', space=sflag, size = 0x4, offset = 0, fixed_abs, tag = 'sflag constant byte address 0x0 - dummy sync flag']
  #allocation34 [shape = 's32[]', space=sflag, size = 0x4, offset = 0, fixed_abs, tag = 'sflag constant byte address 0x0 - dummy sync flag']
  #allocation35 [shape = 's32[]', space=sflag, size = 0x4, offset = 0, fixed_abs, tag = 'sflag constant byte address 0x0 - dummy sync flag']
  #allocation36 [shape = 's32[]', space=sflag, size = 0x4, offset = 0, fixed_abs, tag = 'sflag constant byte address 0x0 - dummy sync flag']
  #allocation37 [shape = 's32[]', space=sflag, size = 0x4, offset = 0, fixed_abs, tag = 'sflag constant byte address 0x0 - dummy sync flag']
  #allocation38 [shape = 's32[]', space=sflag, size = 0x4, offset = 0, fixed_abs, tag = 'sflag constant byte address 0x0 - dummy sync flag']
  #allocation39 [shape = 's32[]', space=sflag, size = 0x4, offset = 0, fixed_abs, tag = 'sflag constant byte address 0x0 - dummy sync flag']
  #allocation40 [shape = 's32[]', space=sflag, size = 0x4, offset = 0, fixed_abs, tag = 'sflag constant byte address 0x0 - dummy sync flag']
  #allocation41 [shape = 's32[]', space=sflag, size = 0x4, offset = 0, fixed_abs, tag = 'sflag constant byte address 0x0 - dummy sync flag']
  %s0 = inlined_call_operand.hbm [shape: s32[16], index: 0, kind: input, shape index: {}]
  %s1 = inlined_call_operand.hbm [shape: f32[16,32], index: 1, kind: input, shape index: {}]
  %s2 = inlined_call_operand.hbm [shape: f32[16,32], index: 2, kind: output, shape index: {}]
  %s3 = sld [smem:[#allocation0]]
  $region74: #{tpu_custom_call.1} parent=0
    _
  %s5 = ssub.s32 1, %s3
  %s6 = scalar_select 0, %s5, %s3
  %s8 = sshll.u32 %s0, 4
  %s9 = int_to_ptr.hbm [resolvable:$true] %s8
  %11 = dma.hbm_to_smem %s9, 16, [#allocation5], [#allocation4]
  %13 = dma.done [#allocation4], 16
  %14 = sfence
  $region1: #{tpu_custom_call.1} parent=0
    #allocation6 [shape = 'u8[8192]{0}', space=vmem, size = 0x2000, scoped, tag = 'output window, operand 0, single buffered']
    #allocation7 [shape = 's32[1]{0}', space=sflag, size = 0x4, scoped, tag = 'scoped memory for tpu_custom_call.1']
    %15 = vsyncpa [#allocation7], 0
    %s16 = smul.u32 0, 16
    %s17 = sld [smem:[#allocation5 + %s16]]
    %p18 = scmp.gt.s32.totalorder %s17, 0
    %s19 = scalar_select %p18, %s17, 0
    %p20 = scmp.lt.s32.totalorder %s19, 15
    %s21 = scalar_select %p20, %s19, 15
    %s22 = scalar_lea.hbm %s1, %s21
    // Predicated region
    $region2: #{tpu_custom_call.1} parent=1 // pred_check
      _
    $region3: #{tpu_custom_call.1} parent=1 // pred_check_branch
      %24 = sbr.rel target = $region5
    $region4: #{tpu_custom_call.1} parent=1 // pred_region
      %25 = sst [smem:[#allocation10]] [#allocation9]
      %26 = sst [smem:[#allocation11]] [#allocation8]
    $region5: #{tpu_custom_call.1} parent=1 // pred_fallthru
      _
    %28 = shalt.err (0)
    %s30 = sshll.u32 %s22, 4
    %s31 = int_to_ptr.hbm [resolvable:$true] %s30
    %s32 = sshll.u32 [#allocation2], 4
    %s33 = int_to_ptr.vmem [resolvable:$true] %s32
    %35 = dma.hbm_to_vmem [thread:$0]  %s31, 16, %s33, [#allocation3]
    %s36 = sadd.s32 %s16, 1
    %s37 = sld [smem:[#allocation5 + %s36]]
    %p38 = scmp.gt.s32.totalorder %s37, 0
    %s39 = scalar_select %p38, %s37, 0
    %p40 = scmp.lt.s32.totalorder %s39, 15
    %s41 = scalar_select %p40, %s39, 15
    %s42 = scalar_lea.hbm %s1, %s41
    %s43 = scalar_lea.vmem [#allocation2], 1
    %s44 = scalar_lea.sflag [#allocation3], 1
    // Predicated region
    $region6: #{tpu_custom_call.1} parent=1 // pred_check
      _
    $region7: #{tpu_custom_call.1} parent=1 // pred_check_branch
      %46 = sbr.rel target = $region9
    $region8: #{tpu_custom_call.1} parent=1 // pred_region
      %47 = sst [smem:[#allocation10]] [#allocation13]
      %48 = sst [smem:[#allocation11]] [#allocation12]
    $region9: #{tpu_custom_call.1} parent=1 // pred_fallthru
      _
    %50 = shalt.err (0)
    %s52 = sshll.u32 %s42, 4
    %s53 = int_to_ptr.hbm [resolvable:$true] %s52
    %s54 = sshll.u32 %s43, 4
    %s55 = int_to_ptr.vmem [resolvable:$true] %s54
    %57 = dma.hbm_to_vmem [thread:$0]  %s53, 16, %s55, %s44
    %s58 = sadd.s32 %s16, 2
    %s59 = sld [smem:[#allocation5 + %s58]]
    %p60 = scmp.gt.s32.totalorder %s59, 0
    %s61 = scalar_select %p60, %s59, 0
    %p62 = scmp.lt.s32.totalorder %s61, 15
    %s63 = scalar_select %p62, %s61, 15
    %s64 = scalar_lea.hbm %s1, %s63
    %s65 = scalar_lea.vmem [#allocation2], 2
    %s66 = scalar_lea.sflag [#allocation3], 2
    // Predicated region
    $region10: #{tpu_custom_call.1} parent=1 // pred_check
      _
    $region11: #{tpu_custom_call.1} parent=1 // pred_check_branch
      %68 = sbr.rel target = $region13
    $region12: #{tpu_custom_call.1} parent=1 // pred_region
      %69 = sst [smem:[#allocation10]] [#allocation15]
      %70 = sst [smem:[#allocation11]] [#allocation14]
    $region13: #{tpu_custom_call.1} parent=1 // pred_fallthru
      _
    %72 = shalt.err (0)
    %s74 = sshll.u32 %s64, 4
    %s75 = int_to_ptr.hbm [resolvable:$true] %s74
    %s76 = sshll.u32 %s65, 4
    %s77 = int_to_ptr.vmem [resolvable:$true] %s76
    %79 = dma.hbm_to_vmem [thread:$0]  %s75, 16, %s77, %s66
    %s80 = sadd.s32 %s16, 3
    %s81 = sld [smem:[#allocation5 + %s80]]
    %p82 = scmp.gt.s32.totalorder %s81, 0
    %s83 = scalar_select %p82, %s81, 0
    %p84 = scmp.lt.s32.totalorder %s83, 15
    %s85 = scalar_select %p84, %s83, 15
    %s86 = scalar_lea.hbm %s1, %s85
    %s87 = scalar_lea.vmem [#allocation2], 3
    %s88 = scalar_lea.sflag [#allocation3], 3
    // Predicated region
    $region14: #{tpu_custom_call.1} parent=1 // pred_check
      _
    $region15: #{tpu_custom_call.1} parent=1 // pred_check_branch
      %90 = sbr.rel target = $region17
    $region16: #{tpu_custom_call.1} parent=1 // pred_region
      %91 = sst [smem:[#allocation10]] [#allocation17]
      %92 = sst [smem:[#allocation11]] [#allocation16]
    $region17: #{tpu_custom_call.1} parent=1 // pred_fallthru
      _
    %94 = shalt.err (0)
    %s96 = sshll.u32 %s86, 4
    %s97 = int_to_ptr.hbm [resolvable:$true] %s96
    %s98 = sshll.u32 %s87, 4
    %s99 = int_to_ptr.vmem [resolvable:$true] %s98
    %101 = dma.hbm_to_vmem [thread:$0]  %s97, 16, %s99, %s88
    %s102 = sadd.s32 %s16, 4
    %s103 = sld [smem:[#allocation5 + %s102]]
    %p104 = scmp.gt.s32.totalorder %s103, 0
    %s105 = scalar_select %p104, %s103, 0
    %p106 = scmp.lt.s32.totalorder %s105, 15
    %s107 = scalar_select %p106, %s105, 15
    %s108 = scalar_lea.hbm %s1, %s107
    %s109 = scalar_lea.vmem [#allocation2], 4
    %s110 = scalar_lea.sflag [#allocation3], 4
    // Predicated region
    $region18: #{tpu_custom_call.1} parent=1 // pred_check
      _
    $region19: #{tpu_custom_call.1} parent=1 // pred_check_branch
      %112 = sbr.rel target = $region21
    $region20: #{tpu_custom_call.1} parent=1 // pred_region
      %113 = sst [smem:[#allocation10]] [#allocation19]
      %114 = sst [smem:[#allocation11]] [#allocation18]
    $region21: #{tpu_custom_call.1} parent=1 // pred_fallthru
      _
    %116 = shalt.err (0)
    %s118 = sshll.u32 %s108, 4
    %s119 = int_to_ptr.hbm [resolvable:$true] %s118
    %s120 = sshll.u32 %s109, 4
    %s121 = int_to_ptr.vmem [resolvable:$true] %s120
    %123 = dma.hbm_to_vmem [thread:$0]  %s119, 16, %s121, %s110
    %s124 = sadd.s32 %s16, 5
    %s125 = sld [smem:[#allocation5 + %s124]]
    %p126 = scmp.gt.s32.totalorder %s125, 0
    %s127 = scalar_select %p126, %s125, 0
    %p128 = scmp.lt.s32.totalorder %s127, 15
    %s129 = scalar_select %p128, %s127, 15
    %s130 = scalar_lea.hbm %s1, %s129
    %s131 = scalar_lea.vmem [#allocation2], 5
    %s132 = scalar_lea.sflag [#allocation3], 5
    // Predicated region
    $region22: #{tpu_custom_call.1} parent=1 // pred_check
      _
    $region23: #{tpu_custom_call.1} parent=1 // pred_check_branch
      %134 = sbr.rel target = $region25
    $region24: #{tpu_custom_call.1} parent=1 // pred_region
      %135 = sst [smem:[#allocation10]] [#allocation21]
      %136 = sst [smem:[#allocation11]] [#allocation20]
    $region25: #{tpu_custom_call.1} parent=1 // pred_fallthru
      _
    %138 = shalt.err (0)
    %s140 = sshll.u32 %s130, 4
    %s141 = int_to_ptr.hbm [resolvable:$true] %s140
    %s142 = sshll.u32 %s131, 4
    %s143 = int_to_ptr.vmem [resolvable:$true] %s142
    %145 = dma.hbm_to_vmem [thread:$0]  %s141, 16, %s143, %s132
    %s146 = sadd.s32 %s16, 6
    %s147 = sld [smem:[#allocation5 + %s146]]
    %p148 = scmp.gt.s32.totalorder %s147, 0
    %s149 = scalar_select %p148, %s147, 0
    %p150 = scmp.lt.s32.totalorder %s149, 15
    %s151 = scalar_select %p150, %s149, 15
    %s152 = scalar_lea.hbm %s1, %s151
    %s153 = scalar_lea.vmem [#allocation2], 6
    %s154 = scalar_lea.sflag [#allocation3], 6
    // Predicated region
    $region26: #{tpu_custom_call.1} parent=1 // pred_check
      _
    $region27: #{tpu_custom_call.1} parent=1 // pred_check_branch
      %156 = sbr.rel target = $region29
    $region28: #{tpu_custom_call.1} parent=1 // pred_region
      %157 = sst [smem:[#allocation10]] [#allocation23]
      %158 = sst [smem:[#allocation11]] [#allocation22]
    $region29: #{tpu_custom_call.1} parent=1 // pred_fallthru
      _
    %160 = shalt.err (0)
    %s162 = sshll.u32 %s152, 4
    %s163 = int_to_ptr.hbm [resolvable:$true] %s162
    %s164 = sshll.u32 %s153, 4
    %s165 = int_to_ptr.vmem [resolvable:$true] %s164
    %167 = dma.hbm_to_vmem [thread:$0]  %s163, 16, %s165, %s154
    %s168 = sadd.s32 %s16, 7
    %s169 = sld [smem:[#allocation5 + %s168]]
    %p170 = scmp.gt.s32.totalorder %s169, 0
    %s171 = scalar_select %p170, %s169, 0
    %p172 = scmp.lt.s32.totalorder %s171, 15
    %s173 = scalar_select %p172, %s171, 15
    %s174 = scalar_lea.hbm %s1, %s173
    %s175 = scalar_lea.vmem [#allocation2], 7
    %s176 = scalar_lea.sflag [#allocation3], 7
    // Predicated region
    $region30: #{tpu_custom_call.1} parent=1 // pred_check
      _
    $region31: #{tpu_custom_call.1} parent=1 // pred_check_branch
      %178 = sbr.rel target = $region33
    $region32: #{tpu_custom_call.1} parent=1 // pred_region
      %179 = sst [smem:[#allocation10]] [#allocation25]
      %180 = sst [smem:[#allocation11]] [#allocation24]
    $region33: #{tpu_custom_call.1} parent=1 // pred_fallthru
      _
    %182 = shalt.err (0)
    %s184 = sshll.u32 %s174, 4
    %s185 = int_to_ptr.hbm [resolvable:$true] %s184
    %s186 = sshll.u32 %s175, 4
    %s187 = int_to_ptr.vmem [resolvable:$true] %s186
    %189 = dma.hbm_to_vmem [thread:$0]  %s185, 16, %s187, %s176
    %s190 = sadd.s32 %s16, 8
    %s191 = sld [smem:[#allocation5 + %s190]]
    %p192 = scmp.gt.s32.totalorder %s191, 0
    %s193 = scalar_select %p192, %s191, 0
    %p194 = scmp.lt.s32.totalorder %s193, 15
    %s195 = scalar_select %p194, %s193, 15
    %s196 = scalar_lea.hbm %s1, %s195
    %s197 = scalar_lea.vmem [#allocation2], 8
    %s198 = scalar_lea.sflag [#allocation3], 8
    // Predicated region
    $region34: #{tpu_custom_call.1} parent=1 // pred_check
      _
    $region35: #{tpu_custom_call.1} parent=1 // pred_check_branch
      %200 = sbr.rel target = $region37
    $region36: #{tpu_custom_call.1} parent=1 // pred_region
      %201 = sst [smem:[#allocation10]] [#allocation27]
      %202 = sst [smem:[#allocation11]] [#allocation26]
    $region37: #{tpu_custom_call.1} parent=1 // pred_fallthru
      _
    %204 = shalt.err (0)
    %s206 = sshll.u32 %s196, 4
    %s207 = int_to_ptr.hbm [resolvable:$true] %s206
    %s208 = sshll.u32 %s197, 4
    %s209 = int_to_ptr.vmem [resolvable:$true] %s208
    %211 = dma.hbm_to_vmem [thread:$0]  %s207, 16, %s209, %s198
    %s212 = sadd.s32 %s16, 9
    %s213 = sld [smem:[#allocation5 + %s212]]
    %p214 = scmp.gt.s32.totalorder %s213, 0
    %s215 = scalar_select %p214, %s213, 0
    %p216 = scmp.lt.s32.totalorder %s215, 15
    %s217 = scalar_select %p216, %s215, 15
    %s218 = scalar_lea.hbm %s1, %s217
    %s219 = scalar_lea.vmem [#allocation2], 9
    %s220 = scalar_lea.sflag [#allocation3], 9
    // Predicated region
    $region38: #{tpu_custom_call.1} parent=1 // pred_check
      _
    $region39: #{tpu_custom_call.1} parent=1 // pred_check_branch
      %222 = sbr.rel target = $region41
    $region40: #{tpu_custom_call.1} parent=1 // pred_region
      %223 = sst [smem:[#allocation10]] [#allocation29]
      %224 = sst [smem:[#allocation11]] [#allocation28]
    $region41: #{tpu_custom_call.1} parent=1 // pred_fallthru
      _
    %226 = shalt.err (0)
    %s228 = sshll.u32 %s218, 4
    %s229 = int_to_ptr.hbm [resolvable:$true] %s228
    %s230 = sshll.u32 %s219, 4
    %s231 = int_to_ptr.vmem [resolvable:$true] %s230
    %233 = dma.hbm_to_vmem [thread:$0]  %s229, 16, %s231, %s220
    %s234 = sadd.s32 %s16, 10
    %s235 = sld [smem:[#allocation5 + %s234]]
    %p236 = scmp.gt.s32.totalorder %s235, 0
    %s237 = scalar_select %p236, %s235, 0
    %p238 = scmp.lt.s32.totalorder %s237, 15
    %s239 = scalar_select %p238, %s237, 15
    %s240 = scalar_lea.hbm %s1, %s239
    %s241 = scalar_lea.vmem [#allocation2], 10
    %s242 = scalar_lea.sflag [#allocation3], 10
    // Predicated region
    $region42: #{tpu_custom_call.1} parent=1 // pred_check
      _
    $region43: #{tpu_custom_call.1} parent=1 // pred_check_branch
      %244 = sbr.rel target = $region45
    $region44: #{tpu_custom_call.1} parent=1 // pred_region
      %245 = sst [smem:[#allocation10]] [#allocation31]
      %246 = sst [smem:[#allocation11]] [#allocation30]
    $region45: #{tpu_custom_call.1} parent=1 // pred_fallthru
      _
    %248 = shalt.err (0)
    %s250 = sshll.u32 %s240, 4
    %s251 = int_to_ptr.hbm [resolvable:$true] %s250
    %s252 = sshll.u32 %s241, 4
    %s253 = int_to_ptr.vmem [resolvable:$true] %s252
    %255 = dma.hbm_to_vmem [thread:$0]  %s251, 16, %s253, %s242
    %s256 = sadd.s32 %s16, 11
    %s257 = sld [smem:[#allocation5 + %s256]]
    %p258 = scmp.gt.s32.totalorder %s257, 0
    %s259 = scalar_select %p258, %s257, 0
    %p260 = scmp.lt.s32.totalorder %s259, 15
    %s261 = scalar_select %p260, %s259, 15
    %s262 = scalar_lea.hbm %s1, %s261
    %s263 = scalar_lea.vmem [#allocation2], 11
    %s264 = scalar_lea.sflag [#allocation3], 11
    // Predicated region
    $region46: #{tpu_custom_call.1} parent=1 // pred_check
      _
    $region47: #{tpu_custom_call.1} parent=1 // pred_check_branch
      %266 = sbr.rel target = $region49
    $region48: #{tpu_custom_call.1} parent=1 // pred_region
      %267 = sst [smem:[#allocation10]] [#allocation33]
      %268 = sst [smem:[#allocation11]] [#allocation32]
    $region49: #{tpu_custom_call.1} parent=1 // pred_fallthru
      _
    %270 = shalt.err (0)
    %s272 = sshll.u32 %s262, 4
    %s273 = int_to_ptr.hbm [resolvable:$true] %s272
    %s274 = sshll.u32 %s263, 4
    %s275 = int_to_ptr.vmem [resolvable:$true] %s274
    %277 = dma.hbm_to_vmem [thread:$0]  %s273, 16, %s275, %s264
    %s278 = sadd.s32 %s16, 12
    %s279 = sld [smem:[#allocation5 + %s278]]
    %p280 = scmp.gt.s32.totalorder %s279, 0
    %s281 = scalar_select %p280, %s279, 0
    %p282 = scmp.lt.s32.totalorder %s281, 15
    %s283 = scalar_select %p282, %s281, 15
    %s284 = scalar_lea.hbm %s1, %s283
    %s285 = scalar_lea.vmem [#allocation2], 12
    %s286 = scalar_lea.sflag [#allocation3], 12
    // Predicated region
    $region50: #{tpu_custom_call.1} parent=1 // pred_check
      _
    $region51: #{tpu_custom_call.1} parent=1 // pred_check_branch
      %288 = sbr.rel target = $region53
    $region52: #{tpu_custom_call.1} parent=1 // pred_region
      %289 = sst [smem:[#allocation10]] [#allocation35]
      %290 = sst [smem:[#allocation11]] [#allocation34]
    $region53: #{tpu_custom_call.1} parent=1 // pred_fallthru
      _
    %292 = shalt.err (0)
    %s294 = sshll.u32 %s284, 4
    %s295 = int_to_ptr.hbm [resolvable:$true] %s294
    %s296 = sshll.u32 %s285, 4
    %s297 = int_to_ptr.vmem [resolvable:$true] %s296
    %299 = dma.hbm_to_vmem [thread:$0]  %s295, 16, %s297, %s286
    %s300 = sadd.s32 %s16, 13
    %s301 = sld [smem:[#allocation5 + %s300]]
    %p302 = scmp.gt.s32.totalorder %s301, 0
    %s303 = scalar_select %p302, %s301, 0
    %p304 = scmp.lt.s32.totalorder %s303, 15
    %s305 = scalar_select %p304, %s303, 15
    %s306 = scalar_lea.hbm %s1, %s305
    %s307 = scalar_lea.vmem [#allocation2], 13
    %s308 = scalar_lea.sflag [#allocation3], 13
    // Predicated region
    $region54: #{tpu_custom_call.1} parent=1 // pred_check
      _
    $region55: #{tpu_custom_call.1} parent=1 // pred_check_branch
      %310 = sbr.rel target = $region57
    $region56: #{tpu_custom_call.1} parent=1 // pred_region
      %311 = sst [smem:[#allocation10]] [#allocation37]
      %312 = sst [smem:[#allocation11]] [#allocation36]
    $region57: #{tpu_custom_call.1} parent=1 // pred_fallthru
      _
    %314 = shalt.err (0)
    %s316 = sshll.u32 %s306, 4
    %s317 = int_to_ptr.hbm [resolvable:$true] %s316
    %s318 = sshll.u32 %s307, 4
    %s319 = int_to_ptr.vmem [resolvable:$true] %s318
    %321 = dma.hbm_to_vmem [thread:$0]  %s317, 16, %s319, %s308
    %s322 = sadd.s32 %s16, 14
    %s323 = sld [smem:[#allocation5 + %s322]]
    %p324 = scmp.gt.s32.totalorder %s323, 0
    %s325 = scalar_select %p324, %s323, 0
    %p326 = scmp.lt.s32.totalorder %s325, 15
    %s327 = scalar_select %p326, %s325, 15
    %s328 = scalar_lea.hbm %s1, %s327
    %s329 = scalar_lea.vmem [#allocation2], 14
    %s330 = scalar_lea.sflag [#allocation3], 14
    // Predicated region
    $region58: #{tpu_custom_call.1} parent=1 // pred_check
      _
    $region59: #{tpu_custom_call.1} parent=1 // pred_check_branch
      %332 = sbr.rel target = $region61
    $region60: #{tpu_custom_call.1} parent=1 // pred_region
      %333 = sst [smem:[#allocation10]] [#allocation39]
      %334 = sst [smem:[#allocation11]] [#allocation38]
    $region61: #{tpu_custom_call.1} parent=1 // pred_fallthru
      _
    %336 = shalt.err (0)
    %s338 = sshll.u32 %s328, 4
    %s339 = int_to_ptr.hbm [resolvable:$true] %s338
    %s340 = sshll.u32 %s329, 4
    %s341 = int_to_ptr.vmem [resolvable:$true] %s340
    %343 = dma.hbm_to_vmem [thread:$0]  %s339, 16, %s341, %s330
    %s344 = sadd.s32 %s16, 15
    %s345 = sld [smem:[#allocation5 + %s344]]
    %p346 = scmp.gt.s32.totalorder %s345, 0
    %s347 = scalar_select %p346, %s345, 0
    %p348 = scmp.lt.s32.totalorder %s347, 15
    %s349 = scalar_select %p348, %s347, 15
    %s350 = scalar_lea.hbm %s1, %s349
    %s351 = scalar_lea.vmem [#allocation2], 15
    %s352 = scalar_lea.sflag [#allocation3], 15
    // Predicated region
    $region62: #{tpu_custom_call.1} parent=1 // pred_check
      _
    $region63: #{tpu_custom_call.1} parent=1 // pred_check_branch
      %354 = sbr.rel target = $region65
    $region64: #{tpu_custom_call.1} parent=1 // pred_region
      %355 = sst [smem:[#allocation10]] [#allocation41]
      %356 = sst [smem:[#allocation11]] [#allocation40]
    $region65: #{tpu_custom_call.1} parent=1 // pred_fallthru
      _
    %358 = shalt.err (0)
    %s360 = sshll.u32 %s350, 4
    %s361 = int_to_ptr.hbm [resolvable:$true] %s360
    %s362 = sshll.u32 %s351, 4
    %s363 = int_to_ptr.vmem [resolvable:$true] %s362
    %365 = dma.hbm_to_vmem [thread:$0]  %s361, 16, %s363, %s352
    %s366 = smul.u32 1, 1
    %s367 = sshll.u32 %s366, 4
    %368 = dma.done [#allocation3], %s367
    %s369 = sshll.u32 %s366, 4
    %370 = dma.done %s44, %s369
    %s371 = sshll.u32 %s366, 4
    %372 = dma.done %s66, %s371
    %s373 = sshll.u32 %s366, 4
    %374 = dma.done %s88, %s373
    %s375 = sshll.u32 %s366, 4
    %376 = dma.done %s110, %s375
    %s377 = sshll.u32 %s366, 4
    %378 = dma.done %s132, %s377
    %s379 = sshll.u32 %s366, 4
    %380 = dma.done %s154, %s379
    %s381 = sshll.u32 %s366, 4
    %382 = dma.done %s176, %s381
    %s383 = sshll.u32 %s366, 4
    %384 = dma.done %s198, %s383
    %s385 = sshll.u32 %s366, 4
    %386 = dma.done %s220, %s385
    %s387 = sshll.u32 %s366, 4
    %388 = dma.done %s242, %s387
    %s389 = sshll.u32 %s366, 4
    %390 = dma.done %s264, %s389
    %s391 = sshll.u32 %s366, 4
    %392 = dma.done %s286, %s391
    %s393 = sshll.u32 %s366, 4
    %394 = dma.done %s308, %s393
    %s395 = sshll.u32 %s366, 4
    %396 = dma.done %s330, %s395
    %s397 = sshll.u32 %s366, 4
    %398 = dma.done %s352, %s397
    %v399 = vld [vmem:[#allocation2] sm:$0xff]
    %v400 = vld [vmem:[#allocation2 + $0x8] sm:$0xff]
    %vm401 = vcmask 261120
    %402 = vst.msk [vmem:[#allocation6] sm:$0xff] %vm401, %v399
    %403 = vst.msk [vmem:[#allocation6 + $0x8] sm:$0xff] %vm401, %v400
    // Predicated region
    $region66: #{tpu_custom_call.1} parent=1 // pred_check
      _
    $region67: #{tpu_custom_call.1} parent=1 // pred_check_branch
      %405 = sbr.rel (0) target = $region69
    $region68: #{tpu_custom_call.1} parent=1 // pred_region
      %407 = vsyncadd [#allocation7], 0
      %s408 = sshll.u32 [#allocation6], 4
      %s409 = int_to_ptr.vmem [resolvable:$true] %s408
      %s410 = sshll.u32 %s2, 4
      %s411 = int_to_ptr.hbm [resolvable:$true] %s410
      %416 = dma.vmem_to_hbm [thread:$0]  %s409, 256, %s411, [#allocation7], 128, 128, 8
    $region69: #{tpu_custom_call.1} parent=1 // pred_fallthru
      _
    // Predicated region
    $region70: #{tpu_custom_call.1} parent=1 // pred_check
      _
    $region71: #{tpu_custom_call.1} parent=1 // pred_check_branch
      %418 = sbr.rel (0) target = $region73
    $region72: #{tpu_custom_call.1} parent=1 // pred_region
      %420 = dma.done [#allocation7], 256
    $region73: #{tpu_custom_call.1} parent=1 // pred_fallthru
      _
    %421 = vsyncpa [#allocation7], 1
  %422 = vsyncmov [#allocation3]
  %s423 = vpop.sfrf %422
  %p424 = scmp.eq.s32.totalorder %s423, 0
  %p425 = pneg %p424
  %427 = shalt.err (%p425)
  %s428 = scalar_lea.sflag [#allocation3], 1
  %429 = vsyncmov %s428
  %s430 = vpop.sfrf %429
  %p431 = scmp.eq.s32.totalorder %s430, 0
  %p432 = pneg %p431
  %434 = shalt.err (%p432)
  %s435 = scalar_lea.sflag [#allocation3], 2
  %436 = vsyncmov %s435
  %s437 = vpop.sfrf %436
  %p438 = scmp.eq.s32.totalorder %s437, 0
  %p439 = pneg %p438
  %441 = shalt.err (%p439)
  %s442 = scalar_lea.sflag [#allocation3], 3
  %443 = vsyncmov %s442
  %s444 = vpop.sfrf %443
  %p445 = scmp.eq.s32.totalorder %s444, 0
  %p446 = pneg %p445
  %448 = shalt.err (%p446)
  %s449 = scalar_lea.sflag [#allocation3], 4
  %450 = vsyncmov %s449
  %s451 = vpop.sfrf %450
  %p452 = scmp.eq.s32.totalorder %s451, 0
  %p453 = pneg %p452
  %455 = shalt.err (%p453)
  %s456 = scalar_lea.sflag [#allocation3], 5
  %457 = vsyncmov %s456
  %s458 = vpop.sfrf %457
  %p459 = scmp.eq.s32.totalorder %s458, 0
  %p460 = pneg %p459
  %462 = shalt.err (%p460)
  %s463 = scalar_lea.sflag [#allocation3], 6
  %464 = vsyncmov %s463
  %s465 = vpop.sfrf %464
  %p466 = scmp.eq.s32.totalorder %s465, 0
  %p467 = pneg %p466
  %469 = shalt.err (%p467)
  %s470 = scalar_lea.sflag [#allocation3], 7
  %471 = vsyncmov %s470
  %s472 = vpop.sfrf %471
  %p473 = scmp.eq.s32.totalorder %s472, 0
  %p474 = pneg %p473
  %476 = shalt.err (%p474)
  %s477 = scalar_lea.sflag [#allocation3], 8
  %478 = vsyncmov %s477
  %s479 = vpop.sfrf %478
  %p480 = scmp.eq.s32.totalorder %s479, 0
  %p481 = pneg %p480
  %483 = shalt.err (%p481)
  %s484 = scalar_lea.sflag [#allocation3], 9
  %485 = vsyncmov %s484
  %s486 = vpop.sfrf %485
  %p487 = scmp.eq.s32.totalorder %s486, 0
  %p488 = pneg %p487
  %490 = shalt.err (%p488)
  %s491 = scalar_lea.sflag [#allocation3], 10
  %492 = vsyncmov %s491
  %s493 = vpop.sfrf %492
  %p494 = scmp.eq.s32.totalorder %s493, 0
  %p495 = pneg %p494
  %497 = shalt.err (%p495)
  %s498 = scalar_lea.sflag [#allocation3], 11
  %499 = vsyncmov %s498
  %s500 = vpop.sfrf %499
  %p501 = scmp.eq.s32.totalorder %s500, 0
  %p502 = pneg %p501
  %504 = shalt.err (%p502)
  %s505 = scalar_lea.sflag [#allocation3], 12
  %506 = vsyncmov %s505
  %s507 = vpop.sfrf %506
  %p508 = scmp.eq.s32.totalorder %s507, 0
  %p509 = pneg %p508
  %511 = shalt.err (%p509)
  %s512 = scalar_lea.sflag [#allocation3], 13
  %513 = vsyncmov %s512
  %s514 = vpop.sfrf %513
  %p515 = scmp.eq.s32.totalorder %s514, 0
  %p516 = pneg %p515
  %518 = shalt.err (%p516)
  %s519 = scalar_lea.sflag [#allocation3], 14
  %520 = vsyncmov %s519
  %s521 = vpop.sfrf %520
  %p522 = scmp.eq.s32.totalorder %s521, 0
  %p523 = pneg %p522
  %525 = shalt.err (%p523)
  %s526 = scalar_lea.sflag [#allocation3], 15
  %527 = vsyncmov %s526
  %s528 = vpop.sfrf %527
  %p529 = scmp.eq.s32.totalorder %s528, 0
  %p530 = pneg %p529
  %532 = shalt.err (%p530)

</llo_original>
